<compile_context>
chip_gen: v7x
topology: tpu7x:2x2x1
jax: 0.10.0
libtpu: 0.0.40
codegen_flags: <defaults>
</compile_context>

<pallas_src>
import jax
import jax.numpy as jnp
from jax.experimental import pallas as pl
from jax.experimental.pallas import tpu as pltpu

# ----- model hyper-parameters (GATConv(in=F_IN, out_channels=C, heads=H)) -----
N = 16        # number of nodes
F_IN = 32     # input feature dim
H = 4         # gat heads
C = 8         # gat out_channels per head
OUT_DIM = 16  # projection output dim
NEG_SLOPE = 0.2
MASK_OFF = 1e30   # additive mask offset for non-edges


def gat_proj_kernel(x_ref, adj_ref, w_ref, asrc_ref, adst_ref, wp_ref,
                    bfused_ref, out_ref):
    x = x_ref[...]            # [N, F_IN]
    adj = adj_ref[...]        # [N, N]  adj[i, j] = 1 iff edge j -> i (self loops incl.)
    w = w_ref[...]            # [F_IN, H*C]

    # 1) node feature transform (MXU)
    h = jnp.dot(x, w, preferred_element_type=jnp.float32)           # [N, H*C]

    # 2) per-head attention scores as MXU matmuls against block-diagonal
    #    attention matrices ([H, H*C], built in the wrapper).
    #    Result layout: heads on sublanes, nodes on lanes.
    dn = (((1,), (1,)), ((), ()))   # contract feature dim of both operands
    a_src = jax.lax.dot_general(asrc_ref[...], h, dn,
                                preferred_element_type=jnp.float32)  # [H, N]
    a_dst = jax.lax.dot_general(adst_ref[...], h, dn,
                                preferred_element_type=jnp.float32)  # [H, N]

    # 3) stacked logits e[h, i, j] = a_dst[h, i] + a_src[h, j]; single
    #    leaky_relu / mask / softmax pass over all heads.
    e = a_dst[:, :, None] + a_src[:, None, :]                        # [H, N, N]
    e = jnp.where(e > 0, e, NEG_SLOPE * e)                           # leaky_relu
    e = e + (adj - 1.0)[None, :, :] * MASK_OFF                       # non-edges -> -1e30
    e_max = jnp.max(e, axis=-1, keepdims=True)                       # [H, N, 1]
    p = jnp.exp(e - e_max)                                           # non-edges -> 0
    denom = jnp.sum(p, axis=-1, keepdims=True)                       # >= 1 (self loop)
    alpha = p * pl.reciprocal(denom, approx=True)                    # [H, N, N]

    # 4) aggregation fused with the output projection:
    #    out = sum_h alpha_h @ (h_h @ W_proj_h) + b_fused
    acc = jnp.zeros((N, OUT_DIM), jnp.float32)
    for hh in range(H):  # H = 4, static unroll
        hp = jnp.dot(h[:, hh * C:(hh + 1) * C], wp_ref[hh],
                     preferred_element_type=jnp.float32)             # [N, OUT_DIM]
        acc = acc + jnp.dot(alpha[hh], hp,
                            preferred_element_type=jnp.float32)      # [N, OUT_DIM]
    out_ref[...] = acc + bfused_ref[...]


@jax.jit
def projected_gat_conv(x, adj, w_gat, att_src, att_dst, b_gat, w_proj, b_proj):
    # ---- wrapper-side parameter re-packing (pure layout, traced under jit) ----
    eye = jnp.eye(H, dtype=jnp.float32)
    # block-diagonal attention matrices, already transposed: [H, H*C]
    # att_src_bd[h, h*C + c] = att_src[h, c], zeros elsewhere.
    att_src_bd = (eye[:, :, None] * att_src[None, :, :]).reshape(H, H * C)
    att_dst_bd = (eye[:, :, None] * att_dst[None, :, :]).reshape(H, H * C)
    wp_blocks = w_proj.reshape(H, C, OUT_DIM)          # per-head W_proj blocks
    b_fused = b_gat @ w_proj + b_proj                  # [1, OUT_DIM]

    return pl.pallas_call(
        gat_proj_kernel,
        out_shape=jax.ShapeDtypeStruct((N, OUT_DIM), jnp.float32),
        in_specs=[pl.BlockSpec(memory_space=pltpu.MemorySpace.VMEM)
                  for _ in range(7)],
        out_specs=pl.BlockSpec(memory_space=pltpu.MemorySpace.VMEM),
    )(x, adj, w_gat, att_src_bd, att_dst_bd, wp_blocks, b_fused)


def build_adjacency(edge_index, num_nodes):
    """adj[i, j] = 1 iff there is an edge src=j -> dst=i; self loops added.
    Note: duplicate (parallel) edges collapse to a single mask entry."""
    src, dst = edge_index[0], edge_index[1]
    adj = jnp.zeros((num_nodes, num_nodes), jnp.float32)
    adj = adj.at[dst, src].set(1.0)
    idx = jnp.arange(num_nodes)
    adj = adj.at[idx, idx].set(1.0)   # add_self_loops=True
    return adj


def glorot(key, shape):
    fan_in = shape[-2] if len(shape) > 1 else shape[-1]
    fan_out = shape[-1]
    limit = jnp.sqrt(6.0 / (fan_in + fan_out))
    return jax.random.uniform(key, shape, jnp.float32, -limit, limit)


def reference_forward(x, adj, w_gat, att_src, att_dst, b_gat, w_proj, b_proj):
    """Pure-JAX reference with the original (unfused) GATConv + Linear form."""
    h = x @ w_gat                                    # [N, H*C]
    h3 = h.reshape(N, H, C)
    a_src = jnp.einsum("nhc,hc->nh", h3, att_src)    # [N, H]
    a_dst = jnp.einsum("nhc,hc->nh", h3, att_dst)    # [N, H]
    e = a_dst[:, None, :] + a_src[None, :, :]        # [i, j, h]
    e = jnp.where(e > 0, e, NEG_SLOPE * e)
    mask = (adj > 0)[:, :, None]
    e = jnp.where(mask, e, -jnp.inf)
    alpha = jax.nn.softmax(e, axis=1)
    alpha = jnp.where(mask, alpha, 0.0)
    gat = jnp.einsum("ijh,jhc->ihc", alpha, h3).reshape(N, H * C) + b_gat
    return gat @ w_proj + b_proj


if __name__ == "__main__":
    key = jax.random.PRNGKey(0)
    k_x, k_e, k_w, k_as, k_ad, k_pw, k_pb = jax.random.split(key, 7)

    # deterministic inputs
    x = jax.random.normal(k_x, (N, F_IN), jnp.float32)
    num_edges = 48
    src = jax.random.randint(k_e, (num_edges,), 0, N)
    dst = jax.random.randint(jax.random.fold_in(k_e, 1), (num_edges,), 0, N)
    edge_index = jnp.stack([src, dst], axis=0)          # [2, E]
    adj = build_adjacency(edge_index, N)

    # deterministic parameters (GATConv lin has no bias; gat bias init = zeros)
    w_gat = glorot(k_w, (F_IN, H * C))
    att_src = glorot(k_as, (H, C))
    att_dst = glorot(k_ad, (H, C))
    b_gat = jnp.zeros((1, H * C), jnp.float32)
    w_proj = glorot(k_pw, (H * C, OUT_DIM))
    b_proj = jax.random.uniform(
        k_pb, (1, OUT_DIM), jnp.float32,
        -1.0 / jnp.sqrt(H * C), 1.0 / jnp.sqrt(H * C))

    out = projected_gat_conv(x, adj, w_gat, att_src, att_dst, b_gat,
                             w_proj, b_proj)
    out = jax.block_until_ready(out)

    ref = reference_forward(x, adj, w_gat, att_src, att_dst, b_gat,
                            w_proj, b_proj)
    assert out.shape == (N, OUT_DIM)
    assert bool(jnp.all(jnp.isfinite(out)))
    max_err = float(jnp.max(jnp.abs(out - ref)))
    assert max_err < 5e-2, f"max abs err vs reference: {max_err}"
    print("KERNEL_OK")
</pallas_src>

<mosaic_0001>
module attributes {stable_mosaic.version = 11 : i64} {
  func.func @gat_proj_kernel(%arg0: memref<16x32xf32, #tpu.memory_space<vmem>>, %arg1: memref<16x16xf32, #tpu.memory_space<vmem>>, %arg2: memref<32x32xf32, #tpu.memory_space<vmem>>, %arg3: memref<4x32xf32, #tpu.memory_space<vmem>>, %arg4: memref<4x32xf32, #tpu.memory_space<vmem>>, %arg5: memref<4x8x16xf32, #tpu.memory_space<vmem>>, %arg6: memref<1x16xf32, #tpu.memory_space<vmem>>, %arg7: memref<16x16xf32, #tpu.memory_space<vmem>>) attributes {dimension_semantics = [], scalar_prefetch = 0 : i64, scratch_operands = 0 : i64, tpu.core_type = #tpu.core_type<tc>} {
    %c0 = arith.constant 0 : index
    %c0_0 = arith.constant 0 : index
    %0 = vector.load %arg0[%c0, %c0_0] : memref<16x32xf32, #tpu.memory_space<vmem>>, vector<16x32xf32>
    %c0_1 = arith.constant 0 : index
    %c0_2 = arith.constant 0 : index
    %1 = vector.load %arg1[%c0_1, %c0_2] : memref<16x16xf32, #tpu.memory_space<vmem>>, vector<16x16xf32>
    %c0_3 = arith.constant 0 : index
    %c0_4 = arith.constant 0 : index
    %2 = vector.load %arg2[%c0_3, %c0_4] : memref<32x32xf32, #tpu.memory_space<vmem>>, vector<32x32xf32>
    %cst = arith.constant dense<0.000000e+00> : vector<16x32xf32>
    %3 = tpu.matmul %0, %2, %cst {dimension_numbers = #tpu.dot_dimension_numbers<[1], [0], [0], [1], [0, 0, 1, 1], [], []>} : vector<16x32xf32>, vector<32x32xf32>, vector<16x32xf32> -> vector<16x32xf32>
    %c0_5 = arith.constant 0 : index
    %c0_6 = arith.constant 0 : index
    %4 = vector.load %arg3[%c0_5, %c0_6] : memref<4x32xf32, #tpu.memory_space<vmem>>, vector<4x32xf32>
    %cst_7 = arith.constant dense<0.000000e+00> : vector<4x16xf32>
    %5 = tpu.matmul %4, %3, %cst_7 {dimension_numbers = #tpu.dot_dimension_numbers<[1], [1], [0], [0], [0, 0, 1, 0], [], []>} : vector<4x32xf32>, vector<16x32xf32>, vector<4x16xf32> -> vector<4x16xf32>
    %c0_8 = arith.constant 0 : index
    %c0_9 = arith.constant 0 : index
    %6 = vector.load %arg4[%c0_8, %c0_9] : memref<4x32xf32, #tpu.memory_space<vmem>>, vector<4x32xf32>
    %cst_10 = arith.constant dense<0.000000e+00> : vector<4x16xf32>
    %7 = tpu.matmul %6, %3, %cst_10 {dimension_numbers = #tpu.dot_dimension_numbers<[1], [1], [0], [0], [0, 0, 1, 0], [], []>} : vector<4x32xf32>, vector<16x32xf32>, vector<4x16xf32> -> vector<4x16xf32>
    %8 = vector.shape_cast %7 : vector<4x16xf32> to vector<4x16x1xf32>
    %9 = vector.shape_cast %5 : vector<4x16xf32> to vector<4x1x16xf32>
    %10 = vector.broadcast %8 : vector<4x16x1xf32> to vector<4x16x16xf32>
    %11 = vector.broadcast %9 : vector<4x1x16xf32> to vector<4x16x16xf32>
    %12 = arith.addf %10, %11 : vector<4x16x16xf32>
    %cst_11 = arith.constant 0.000000e+00 : f32
    %13 = vector.broadcast %cst_11 : f32 to vector<4x16x16xf32>
    %14 = arith.cmpf ogt, %12, %13 : vector<4x16x16xf32>
    %cst_12 = arith.constant 2.000000e-01 : f32
    %15 = vector.broadcast %cst_12 : f32 to vector<4x16x16xf32>
    %16 = arith.mulf %15, %12 : vector<4x16x16xf32>
    %17 = arith.select %14, %12, %16 : vector<4x16x16xi1>, vector<4x16x16xf32>
    %cst_13 = arith.constant 1.000000e+00 : f32
    %18 = vector.broadcast %cst_13 : f32 to vector<16x16xf32>
    %19 = arith.subf %1, %18 : vector<16x16xf32>
    %20 = vector.shape_cast %19 : vector<16x16xf32> to vector<1x16x16xf32>
    %cst_14 = arith.constant 1.000000e+30 : f32
    %21 = vector.broadcast %cst_14 : f32 to vector<1x16x16xf32>
    %22 = arith.mulf %20, %21 : vector<1x16x16xf32>
    %23 = vector.broadcast %22 : vector<1x16x16xf32> to vector<4x16x16xf32>
    %24 = arith.addf %17, %23 : vector<4x16x16xf32>
    %cst_15 = arith.constant dense<0xFF800000> : vector<4x16xf32>
    %25 = vector.multi_reduction <maximumf>, %24, %cst_15 [2] : vector<4x16x16xf32> to vector<4x16xf32>
    %26 = vector.shape_cast %25 : vector<4x16xf32> to vector<4x16x1xf32>
    %27 = vector.broadcast %26 : vector<4x16x1xf32> to vector<4x16x16xf32>
    %28 = arith.subf %24, %27 : vector<4x16x16xf32>
    %29 = math.exp %28 : vector<4x16x16xf32>
    %cst_16 = arith.constant dense<0.000000e+00> : vector<4x16xf32>
    %30 = vector.multi_reduction <add>, %29, %cst_16 [2] : vector<4x16x16xf32> to vector<4x16xf32>
    %31 = vector.shape_cast %30 : vector<4x16xf32> to vector<4x16x1xf32>
    %32 = tpu.reciprocal %31 {approx = true} : vector<4x16x1xf32> -> vector<4x16x1xf32>
    %33 = vector.broadcast %32 : vector<4x16x1xf32> to vector<4x16x16xf32>
    %34 = arith.mulf %29, %33 : vector<4x16x16xf32>
    %cst_17 = arith.constant 0.000000e+00 : f32
    %35 = vector.broadcast %cst_17 : f32 to vector<16x16xf32>
    %36 = vector.extract_strided_slice %3 {offsets = [0, 0], sizes = [16, 8], strides = [1, 1]} : vector<16x32xf32> to vector<16x8xf32>
    %c0_18 = arith.constant 0 : index
    %c0_19 = arith.constant 0 : index
    %c0_20 = arith.constant 0 : index
    %37 = vector.load %arg5[%c0_18, %c0_19, %c0_20] : memref<4x8x16xf32, #tpu.memory_space<vmem>>, vector<1x8x16xf32>
    %38 = vector.shape_cast %37 : vector<1x8x16xf32> to vector<8x16xf32>
    %cst_21 = arith.constant dense<0.000000e+00> : vector<16x16xf32>
    %39 = tpu.matmul %36, %38, %cst_21 {dimension_numbers = #tpu.dot_dimension_numbers<[1], [0], [0], [1], [0, 0, 1, 1], [], []>} : vector<16x8xf32>, vector<8x16xf32>, vector<16x16xf32> -> vector<16x16xf32>
    %40 = vector.extract_strided_slice %34 {offsets = [0, 0, 0], sizes = [1, 16, 16], strides = [1, 1, 1]} : vector<4x16x16xf32> to vector<1x16x16xf32>
    %41 = vector.shape_cast %40 : vector<1x16x16xf32> to vector<16x16xf32>
    %cst_22 = arith.constant dense<0.000000e+00> : vector<16x16xf32>
    %42 = tpu.matmul %41, %39, %cst_22 {dimension_numbers = #tpu.dot_dimension_numbers<[1], [0], [0], [1], [0, 0, 1, 1], [], []>} : vector<16x16xf32>, vector<16x16xf32>, vector<16x16xf32> -> vector<16x16xf32>
    %43 = arith.addf %35, %42 : vector<16x16xf32>
    %44 = vector.extract_strided_slice %3 {offsets = [0, 8], sizes = [16, 8], strides = [1, 1]} : vector<16x32xf32> to vector<16x8xf32>
    %c1 = arith.constant 1 : index
    %c0_23 = arith.constant 0 : index
    %c0_24 = arith.constant 0 : index
    %45 = vector.load %arg5[%c1, %c0_23, %c0_24] : memref<4x8x16xf32, #tpu.memory_space<vmem>>, vector<1x8x16xf32>
    %46 = vector.shape_cast %45 : vector<1x8x16xf32> to vector<8x16xf32>
    %cst_25 = arith.constant dense<0.000000e+00> : vector<16x16xf32>
    %47 = tpu.matmul %44, %46, %cst_25 {dimension_numbers = #tpu.dot_dimension_numbers<[1], [0], [0], [1], [0, 0, 1, 1], [], []>} : vector<16x8xf32>, vector<8x16xf32>, vector<16x16xf32> -> vector<16x16xf32>
    %48 = vector.extract_strided_slice %34 {offsets = [1, 0, 0], sizes = [1, 16, 16], strides = [1, 1, 1]} : vector<4x16x16xf32> to vector<1x16x16xf32>
    %49 = vector.shape_cast %48 : vector<1x16x16xf32> to vector<16x16xf32>
    %cst_26 = arith.constant dense<0.000000e+00> : vector<16x16xf32>
    %50 = tpu.matmul %49, %47, %cst_26 {dimension_numbers = #tpu.dot_dimension_numbers<[1], [0], [0], [1], [0, 0, 1, 1], [], []>} : vector<16x16xf32>, vector<16x16xf32>, vector<16x16xf32> -> vector<16x16xf32>
    %51 = arith.addf %43, %50 : vector<16x16xf32>
    %52 = vector.extract_strided_slice %3 {offsets = [0, 16], sizes = [16, 8], strides = [1, 1]} : vector<16x32xf32> to vector<16x8xf32>
    %c2 = arith.constant 2 : index
    %c0_27 = arith.constant 0 : index
    %c0_28 = arith.constant 0 : index
    %53 = vector.load %arg5[%c2, %c0_27, %c0_28] : memref<4x8x16xf32, #tpu.memory_space<vmem>>, vector<1x8x16xf32>
    %54 = vector.shape_cast %53 : vector<1x8x16xf32> to vector<8x16xf32>
    %cst_29 = arith.constant dense<0.000000e+00> : vector<16x16xf32>
    %55 = tpu.matmul %52, %54, %cst_29 {dimension_numbers = #tpu.dot_dimension_numbers<[1], [0], [0], [1], [0, 0, 1, 1], [], []>} : vector<16x8xf32>, vector<8x16xf32>, vector<16x16xf32> -> vector<16x16xf32>
    %56 = vector.extract_strided_slice %34 {offsets = [2, 0, 0], sizes = [1, 16, 16], strides = [1, 1, 1]} : vector<4x16x16xf32> to vector<1x16x16xf32>
    %57 = vector.shape_cast %56 : vector<1x16x16xf32> to vector<16x16xf32>
    %cst_30 = arith.constant dense<0.000000e+00> : vector<16x16xf32>
    %58 = tpu.matmul %57, %55, %cst_30 {dimension_numbers = #tpu.dot_dimension_numbers<[1], [0], [0], [1], [0, 0, 1, 1], [], []>} : vector<16x16xf32>, vector<16x16xf32>, vector<16x16xf32> -> vector<16x16xf32>
    %59 = arith.addf %51, %58 : vector<16x16xf32>
    %60 = vector.extract_strided_slice %3 {offsets = [0, 24], sizes = [16, 8], strides = [1, 1]} : vector<16x32xf32> to vector<16x8xf32>
    %c3 = arith.constant 3 : index
    %c0_31 = arith.constant 0 : index
    %c0_32 = arith.constant 0 : index
    %61 = vector.load %arg5[%c3, %c0_31, %c0_32] : memref<4x8x16xf32, #tpu.memory_space<vmem>>, vector<1x8x16xf32>
    %62 = vector.shape_cast %61 : vector<1x8x16xf32> to vector<8x16xf32>
    %cst_33 = arith.constant dense<0.000000e+00> : vector<16x16xf32>
    %63 = tpu.matmul %60, %62, %cst_33 {dimension_numbers = #tpu.dot_dimension_numbers<[1], [0], [0], [1], [0, 0, 1, 1], [], []>} : vector<16x8xf32>, vector<8x16xf32>, vector<16x16xf32> -> vector<16x16xf32>
    %64 = vector.extract_strided_slice %34 {offsets = [3, 0, 0], sizes = [1, 16, 16], strides = [1, 1, 1]} : vector<4x16x16xf32> to vector<1x16x16xf32>
    %65 = vector.shape_cast %64 : vector<1x16x16xf32> to vector<16x16xf32>
    %cst_34 = arith.constant dense<0.000000e+00> : vector<16x16xf32>
    %66 = tpu.matmul %65, %63, %cst_34 {dimension_numbers = #tpu.dot_dimension_numbers<[1], [0], [0], [1], [0, 0, 1, 1], [], []>} : vector<16x16xf32>, vector<16x16xf32>, vector<16x16xf32> -> vector<16x16xf32>
    %67 = arith.addf %59, %66 : vector<16x16xf32>
    %c0_35 = arith.constant 0 : index
    %c0_36 = arith.constant 0 : index
    %68 = vector.load %arg6[%c0_35, %c0_36] : memref<1x16xf32, #tpu.memory_space<vmem>>, vector<1x16xf32>
    %69 = vector.broadcast %68 : vector<1x16xf32> to vector<16x16xf32>
    %70 = arith.addf %67, %69 : vector<16x16xf32>
    %c0_37 = arith.constant 0 : index
    %c0_38 = arith.constant 0 : index
    %71 = vector.load %arg7[%c0_37, %c0_38] : memref<16x16xf32, #tpu.memory_space<vmem>>, vector<16x16xf32>
    tpu.vector_store %arg7[%c0_37, %c0_38], %70 {strides = array<i32>} : memref<16x16xf32, #tpu.memory_space<vmem>>, vector<16x16xf32>,
    return
  }
}

</mosaic_0001>

<llo_original>
// kernel: projected_gat_conv.1
$region0: #{projected_gat_conv.1}
  #allocation0 [shape = 'u32[]', space=smem, size = 0x4, offset = 0x4, fixed_abs, tag = 'smem constant byte address 0x4 - core index']
  #allocation1 [shape = 'u32[144,128]{1,0:T(1,128)}', space=vmem, size = 0x12000, scoped, tag = 'internal scratch']
  %s0 = inlined_call_operand.vmem [shape: f32[16,32], index: 0, kind: input, shape index: {}]
  %s1 = inlined_call_operand.vmem [shape: f32[16,16], index: 1, kind: input, shape index: {}]
  %s2 = inlined_call_operand.vmem [shape: f32[32,32], index: 2, kind: input, shape index: {}]
  %s3 = inlined_call_operand.vmem [shape: f32[4,32], index: 3, kind: input, shape index: {}]
  %s4 = inlined_call_operand.vmem [shape: f32[4,32], index: 4, kind: input, shape index: {}]
  %s5 = inlined_call_operand.vmem [shape: f32[4,8,16], index: 5, kind: input, shape index: {}]
  %s6 = inlined_call_operand.vmem [shape: f32[1,16], index: 6, kind: input, shape index: {}]
  %s7 = inlined_call_operand.hbm [shape: f32[16,16], index: 7, kind: output, shape index: {}]
  %s8 = sld [smem:[#allocation0]]
  $region38: #{projected_gat_conv.1} parent=0
    _
  %s10 = ssub.s32 1, %s8
  %s11 = scalar_select 0, %s10, %s8
  $region1: #{projected_gat_conv.1} parent=0
    #allocation2 [shape = 'u8[8192]{0}', space=vmem, size = 0x2000, scoped, tag = 'output window, operand 0, single buffered']
    #allocation3 [shape = 's32[1]{0}', space=sflag, size = 0x4, scoped, tag = 'scoped memory for projected_gat_conv.1']
    %12 = vsyncpa [#allocation3], 0
    // Predicated region
    $region2: #{projected_gat_conv.1} parent=1 // pred_check
      _
    $region3: #{projected_gat_conv.1} parent=1 // pred_check_branch
      %14 = sbr.rel (0) target = $region5
    $region4: #{projected_gat_conv.1} parent=1 // pred_region
      _
    $region5: #{projected_gat_conv.1} parent=1 // pred_fallthru
      _
    // Predicated region
    $region6: #{projected_gat_conv.1} parent=1 // pred_check
      _
    $region7: #{projected_gat_conv.1} parent=1 // pred_check_branch
      %16 = sbr.rel (0) target = $region9
    $region8: #{projected_gat_conv.1} parent=1 // pred_region
      _
    $region9: #{projected_gat_conv.1} parent=1 // pred_fallthru
      _
    // Predicated region
    $region10: #{projected_gat_conv.1} parent=1 // pred_check
      _
    $region11: #{projected_gat_conv.1} parent=1 // pred_check_branch
      %18 = sbr.rel (0) target = $region13
    $region12: #{projected_gat_conv.1} parent=1 // pred_region
      _
    $region13: #{projected_gat_conv.1} parent=1 // pred_fallthru
      _
    // Predicated region
    $region14: #{projected_gat_conv.1} parent=1 // pred_check
      _
    $region15: #{projected_gat_conv.1} parent=1 // pred_check_branch
      %20 = sbr.rel (0) target = $region17
    $region16: #{projected_gat_conv.1} parent=1 // pred_region
      _
    $region17: #{projected_gat_conv.1} parent=1 // pred_fallthru
      _
    // Predicated region
    $region18: #{projected_gat_conv.1} parent=1 // pred_check
      _
    $region19: #{projected_gat_conv.1} parent=1 // pred_check_branch
      %22 = sbr.rel (0) target = $region21
    $region20: #{projected_gat_conv.1} parent=1 // pred_region
      _
    $region21: #{projected_gat_conv.1} parent=1 // pred_fallthru
      _
    // Predicated region
    $region22: #{projected_gat_conv.1} parent=1 // pred_check
      _
    $region23: #{projected_gat_conv.1} parent=1 // pred_check_branch
      %24 = sbr.rel (0) target = $region25
    $region24: #{projected_gat_conv.1} parent=1 // pred_region
      _
    $region25: #{projected_gat_conv.1} parent=1 // pred_fallthru
      _
    // Predicated region
    $region26: #{projected_gat_conv.1} parent=1 // pred_check
      _
    $region27: #{projected_gat_conv.1} parent=1 // pred_check_branch
      %26 = sbr.rel (0) target = $region29
    $region28: #{projected_gat_conv.1} parent=1 // pred_region
      _
    $region29: #{projected_gat_conv.1} parent=1 // pred_fallthru
      _
    %v27 = vld [vmem:[%s0] sm:$0xff]
    %v28 = vld [vmem:[%s0 + $0x8] sm:$0xff]
    %v29 = vld [vmem:[%s1] sm:$0xff]
    %v30 = vld [vmem:[%s1 + $0x8] sm:$0xff]
    %v31 = vld [vmem:[%s2] sm:$0xff]
    %v32 = vld [vmem:[%s2 + $0x8] sm:$0xff]
    %v33 = vld [vmem:[%s2 + $0x10] sm:$0xff]
    %v34 = vld [vmem:[%s2 + $0x18] sm:$0xff]
    %vm35 = vcmask 261120
    %v37 = vsel %vm35, %v27, 0
    %v40 = vsel %vm35, %v28, 0
    %42 = vmatprep.subr.mxu0 0.0
    %43 = vmatpush1.msra.mxu0 %v31
    %44 = vmatprep.subr.mxu0 0.0
    %45 = vmatpush1.msra.mxu0 %v32
    %46 = vmatprep.subr.mxu0 0.0
    %47 = vmatpush1.msra.mxu0 %v33
    %48 = vmatprep.subr.mxu0 0.0
    %49 = vmatpush1.msra.mxu0 %v34
    %50 = vmatprep.subr.mxu0 0.0
    %51 = vmatpush1.msra.mxu0 0.0
    %52 = vmatprep.subr.mxu0 0.0
    %53 = vmatpush1.msra.mxu0 0.0
    %54 = vmatprep.subr.mxu0 0.0
    %55 = vmatpush1.msra.mxu0 0.0
    %56 = vmatprep.subr.mxu0 0.0
    %57 = vmatpush1.msra.mxu0 0.0
    %58 = vmatprep.subr.mxu0 0.0
    %59 = vmatpush1.msra.mxu0 0.0
    %60 = vmatprep.subr.mxu0 0.0
    %61 = vmatpush1.msra.mxu0 0.0
    %62 = vmatprep.subr.mxu0 0.0
    %63 = vmatpush1.msra.mxu0 0.0
    %64 = vmatprep.subr.mxu0 0.0
    %65 = vmatpush1.msra.mxu0 0.0
    %66 = vmatprep.subr.mxu0 0.0
    %67 = vmatpush1.msra.mxu0 0.0
    %68 = vmatprep.subr.mxu0 0.0
    %69 = vmatpush1.msra.mxu0 0.0
    %70 = vmatprep.subr.mxu0 0.0
    %71 = vmatpush1.msra.mxu0 0.0
    %72 = vmatprep.subr.mxu0 0.0
    %73 = vmatpush1.msra.mxu0 0.0
    %74 = vmatprep.subr.mxu0 0.0
    %75 = vmatpush1.msra.mxu0 0.0
    %76 = vmatprep.subr.mxu0 0.0
    %77 = vmatpush1.msra.mxu0 0.0
    %78 = vmatprep.subr.mxu0 0.0
    %79 = vmatpush1.msra.mxu0 0.0
    %80 = vmatprep.subr.mxu0 0.0
    %81 = vmatpush1.msra.mxu0 0.0
    %82 = vmatprep.subr.mxu0 0.0
    %83 = vmatpush1.msra.mxu0 0.0
    %84 = vmatprep.subr.mxu0 0.0
    %85 = vmatpush1.msra.mxu0 0.0
    %86 = vmatprep.subr.mxu0 0.0
    %87 = vmatpush1.msra.mxu0 0.0
    %88 = vmatprep.subr.mxu0 0.0
    %89 = vmatpush1.msra.mxu0 0.0
    %90 = vmatprep.subr.mxu0 0.0
    %91 = vmatpush1.msra.mxu0 0.0
    %92 = vmatprep.subr.mxu0 0.0
    %93 = vmatpush1.msra.mxu0 0.0
    %94 = vmatprep.subr.mxu0 0.0
    %95 = vmatpush1.msra.mxu0 0.0
    %96 = vmatprep.subr.mxu0 0.0
    %97 = vmatpush1.msra.mxu0 0.0
    %98 = vmatprep.subr.mxu0 0.0
    %99 = vmatpush1.msra.mxu0 0.0
    %100 = vmatprep.subr.mxu0 0.0
    %101 = vmatpush1.msra.mxu0 0.0
    %102 = vmatprep.subr.mxu0 0.0
    %103 = vmatpush1.msra.mxu0 0.0
    %104 = vmatprep.subr.mxu0 0.0
    %105 = vmatpush1.msra.mxu0 0.0
    %106 = vmatprep.mubr.f32.mxu0 0.0
    %107 = vmatmul.mubr.f32.gmra.mrb[0].mxu0 %v37
    %v108 = vpop.f32.mrb[0].mxu0
    %v109 = vadd.f32 0.0, %v108
    %v110 = vpop.f32.mrb[0].mxu0
    %111 = vmatprep.mubr.f32.mxu0 0.0
    %112 = vmatmul.mubr.f32.gmra.mrb[0].mxu0 %v40
    %v113 = vpop.f32.mrb[0].mxu0
    %v114 = vadd.f32 0.0, %v113
    %v115 = vpop.f32.mrb[0].mxu0
    %116 = vdwg.mxu0
    %v117 = vld [vmem:[%s3] sm:$0xf]
    %v119 = vsel %vm35, %v117, 0
    %v122 = vsel %vm35, %v109, 0
    %v125 = vsel %vm35, %v114, 0
    %127 = vmatprep.subr.mxu0 0.0
    %128 = vmatpush1.xpose.msra.mxu0 %v122
    %129 = vmatprep.subr.mxu0 0.0
    %130 = vmatpush1.xpose.msra.mxu0 %v125
    %131 = vmatprep.subr.mxu0 0.0
    %132 = vmatpush1.xpose.msra.mxu0 0.0
    %133 = vmatprep.subr.mxu0 0.0
    %134 = vmatpush1.xpose.msra.mxu0 0.0
    %135 = vmatprep.subr.mxu0 0.0
    %136 = vmatpush1.xpose.msra.mxu0 0.0
    %137 = vmatprep.subr.mxu0 0.0
    %138 = vmatpush1.xpose.msra.mxu0 0.0
    %139 = vmatprep.subr.mxu0 0.0
    %140 = vmatpush1.xpose.msra.mxu0 0.0
    %141 = vmatprep.subr.mxu0 0.0
    %142 = vmatpush1.xpose.msra.mxu0 0.0
    %143 = vmatprep.subr.mxu0 0.0
    %144 = vmatpush1.xpose.msra.mxu0 0.0
    %145 = vmatprep.subr.mxu0 0.0
    %146 = vmatpush1.xpose.msra.mxu0 0.0
    %147 = vmatprep.subr.mxu0 0.0
    %148 = vmatpush1.xpose.msra.mxu0 0.0
    %149 = vmatprep.subr.mxu0 0.0
    %150 = vmatpush1.xpose.msra.mxu0 0.0
    %151 = vmatprep.subr.mxu0 0.0
    %152 = vmatpush1.xpose.msra.mxu0 0.0
    %153 = vmatprep.subr.mxu0 0.0
    %154 = vmatpush1.xpose.msra.mxu0 0.0
    %155 = vmatprep.subr.mxu0 0.0
    %156 = vmatpush1.xpose.msra.mxu0 0.0
    %157 = vmatprep.subr.mxu0 0.0
    %158 = vmatpush1.xpose.msra.mxu0 0.0
    %159 = vmatprep.subr.mxu0 0.0
    %160 = vmatpush1.xpose.msra.mxu0 0.0
    %161 = vmatprep.subr.mxu0 0.0
    %162 = vmatpush1.xpose.msra.mxu0 0.0
    %163 = vmatprep.subr.mxu0 0.0
    %164 = vmatpush1.xpose.msra.mxu0 0.0
    %165 = vmatprep.subr.mxu0 0.0
    %166 = vmatpush1.xpose.msra.mxu0 0.0
    %167 = vmatprep.subr.mxu0 0.0
    %168 = vmatpush1.xpose.msra.mxu0 0.0
    %169 = vmatprep.subr.mxu0 0.0
    %170 = vmatpush1.xpose.msra.mxu0 0.0
    %171 = vmatprep.subr.mxu0 0.0
    %172 = vmatpush1.xpose.msra.mxu0 0.0
    %173 = vmatprep.subr.mxu0 0.0
    %174 = vmatpush1.xpose.msra.mxu0 0.0
    %175 = vmatprep.subr.mxu0 0.0
    %176 = vmatpush1.xpose.msra.mxu0 0.0
    %177 = vmatprep.subr.mxu0 0.0
    %178 = vmatpush1.xpose.msra.mxu0 0.0
    %179 = vmatprep.subr.mxu0 0.0
    %180 = vmatpush1.xpose.msra.mxu0 0.0
    %181 = vmatprep.subr.mxu0 0.0
    %182 = vmatpush1.xpose.msra.mxu0 0.0
    %183 = vmatprep.subr.mxu0 0.0
    %184 = vmatpush1.xpose.msra.mxu0 0.0
    %185 = vmatprep.subr.mxu0 0.0
    %186 = vmatpush1.xpose.msra.mxu0 0.0
    %187 = vmatprep.subr.mxu0 0.0
    %188 = vmatpush1.xpose.msra.mxu0 0.0
    %189 = vmatprep.subr.mxu0 0.0
    %190 = vmatpush1.xpose.msra.mxu0 0.0
    %191 = vmatprep.mubr.f32.mxu0 0.0
    %192 = vmatmul.mubr.f32.gmra.mrb[0].mxu0 %v119
    %v193 = vpop.f32.mrb[0].mxu0
    %v194 = vadd.f32 0.0, %v193
    %v195 = vpop.f32.mrb[0].mxu0
    %196 = vdwg.mxu0
    %v197 = vld [vmem:[%s4] sm:$0xf]
    %v199 = vsel %vm35, %v197, 0
    %201 = vmatprep.subr.mxu0 0.0
    %202 = vmatpush1.xpose.msra.mxu0 %v122
    %203 = vmatprep.subr.mxu0 0.0
    %204 = vmatpush1.xpose.msra.mxu0 %v125
    %205 = vmatprep.subr.mxu0 0.0
    %206 = vmatpush1.xpose.msra.mxu0 0.0
    %207 = vmatprep.subr.mxu0 0.0
    %208 = vmatpush1.xpose.msra.mxu0 0.0
    %209 = vmatprep.subr.mxu0 0.0
    %210 = vmatpush1.xpose.msra.mxu0 0.0
    %211 = vmatprep.subr.mxu0 0.0
    %212 = vmatpush1.xpose.msra.mxu0 0.0
    %213 = vmatprep.subr.mxu0 0.0
    %214 = vmatpush1.xpose.msra.mxu0 0.0
    %215 = vmatprep.subr.mxu0 0.0
    %216 = vmatpush1.xpose.msra.mxu0 0.0
    %217 = vmatprep.subr.mxu0 0.0
    %218 = vmatpush1.xpose.msra.mxu0 0.0
    %219 = vmatprep.subr.mxu0 0.0
    %220 = vmatpush1.xpose.msra.mxu0 0.0
    %221 = vmatprep.subr.mxu0 0.0
    %222 = vmatpush1.xpose.msra.mxu0 0.0
    %223 = vmatprep.subr.mxu0 0.0
    %224 = vmatpush1.xpose.msra.mxu0 0.0
    %225 = vmatprep.subr.mxu0 0.0
    %226 = vmatpush1.xpose.msra.mxu0 0.0
    %227 = vmatprep.subr.mxu0 0.0
    %228 = vmatpush1.xpose.msra.mxu0 0.0
    %229 = vmatprep.subr.mxu0 0.0
    %230 = vmatpush1.xpose.msra.mxu0 0.0
    %231 = vmatprep.subr.mxu0 0.0
    %232 = vmatpush1.xpose.msra.mxu0 0.0
    %233 = vmatprep.subr.mxu0 0.0
    %234 = vmatpush1.xpose.msra.mxu0 0.0
    %235 = vmatprep.subr.mxu0 0.0
    %236 = vmatpush1.xpose.msra.mxu0 0.0
    %237 = vmatprep.subr.mxu0 0.0
    %238 = vmatpush1.xpose.msra.mxu0 0.0
    %239 = vmatprep.subr.mxu0 0.0
    %240 = vmatpush1.xpose.msra.mxu0 0.0
    %241 = vmatprep.subr.mxu0 0.0
    %242 = vmatpush1.xpose.msra.mxu0 0.0
    %243 = vmatprep.subr.mxu0 0.0
    %244 = vmatpush1.xpose.msra.mxu0 0.0
    %245 = vmatprep.subr.mxu0 0.0
    %246 = vmatpush1.xpose.msra.mxu0 0.0
    %247 = vmatprep.subr.mxu0 0.0
    %248 = vmatpush1.xpose.msra.mxu0 0.0
    %249 = vmatprep.subr.mxu0 0.0
    %250 = vmatpush1.xpose.msra.mxu0 0.0
    %251 = vmatprep.subr.mxu0 0.0
    %252 = vmatpush1.xpose.msra.mxu0 0.0
    %253 = vmatprep.subr.mxu0 0.0
    %254 = vmatpush1.xpose.msra.mxu0 0.0
    %255 = vmatprep.subr.mxu0 0.0
    %256 = vmatpush1.xpose.msra.mxu0 0.0
    %257 = vmatprep.subr.mxu0 0.0
    %258 = vmatpush1.xpose.msra.mxu0 0.0
    %259 = vmatprep.subr.mxu0 0.0
    %260 = vmatpush1.xpose.msra.mxu0 0.0
    %261 = vmatprep.subr.mxu0 0.0
    %262 = vmatpush1.xpose.msra.mxu0 0.0
    %263 = vmatprep.subr.mxu0 0.0
    %264 = vmatpush1.xpose.msra.mxu0 0.0
    %265 = vmatprep.mubr.f32.mxu0 0.0
    %266 = vmatmul.mubr.f32.gmra.mrb[0].mxu0 %v199
    %v267 = vpop.f32.mrb[0].mxu0
    %v268 = vadd.f32 0.0, %v267
    %v269 = vpop.f32.mrb[0].mxu0
    %270 = vdwg.mxu0
    %v271 = vlaneseq
    %v272 = vshrl.u32 %v271, 7
    %v273 = vsub.s32 0, %v272
    %v274 = vrot.slane %v268, %v273
    %276 = vbcast.lane.b32.xlu0 %v274, 256
    %v277 = vpop.permute.xlu0 %276
    %s279 = sor.u32 256, 8
    %280 = vbcast.lane.b32.xlu0 %v274, %s279
    %v281 = vpop.permute.xlu0 %280
    %v282 = vlaneseq
    %v283 = vshrl.u32 %v282, 7
    %v284 = vsub.s32 1, %v283
    %v285 = vrot.slane %v268, %v284
    %287 = vbcast.lane.b32.xlu0 %v285, 256
    %v288 = vpop.permute.xlu0 %287
    %s290 = sor.u32 256, 8
    %291 = vbcast.lane.b32.xlu0 %v285, %s290
    %v292 = vpop.permute.xlu0 %291
    %v293 = vlaneseq
    %v294 = vshrl.u32 %v293, 7
    %v295 = vsub.s32 2, %v294
    %v296 = vrot.slane %v268, %v295
    %298 = vbcast.lane.b32.xlu0 %v296, 256
    %v299 = vpop.permute.xlu0 %298
    %s301 = sor.u32 256, 8
    %302 = vbcast.lane.b32.xlu0 %v296, %s301
    %v303 = vpop.permute.xlu0 %302
    %v304 = vlaneseq
    %v305 = vshrl.u32 %v304, 7
    %v306 = vsub.s32 3, %v305
    %v307 = vrot.slane %v268, %v306
    %309 = vbcast.lane.b32.xlu0 %v307, 256
    %v310 = vpop.permute.xlu0 %309
    %s312 = sor.u32 256, 8
    %313 = vbcast.lane.b32.xlu0 %v307, %s312
    %v314 = vpop.permute.xlu0 %313
    %v317 = vunpack.c.l.s4 1966171168
    %v318 = vunpack.c.0.s8 %v317
    %v319 = vlaneseq
    %v320 = vshrl.u32 %v319, 7
    %v321 = vsub.s32 %v318, %v320
    %v322 = vrot.slane %v194, %v321
    %v323 = vcombine.high %v322, %v322
    %v325 = vunpack.c.l.s4 1966171168
    %v326 = vunpack.c.0.s8 %v325
    %v327 = vlaneseq
    %v328 = vshrl.u32 %v327, 7
    %v329 = vsub.s32 %v326, %v328
    %v330 = vrot.slane %v322, %v329
    %v332 = vunpack.c.l.s4 1966171168
    %v333 = vunpack.c.0.s8 %v332
    %v334 = vlaneseq
    %v335 = vshrl.u32 %v334, 7
    %v336 = vsub.s32 %v333, %v335
    %v337 = vrot.slane %v323, %v336
    %v338 = vcombine.high %v330, %v330
    %v339 = vcombine.high %v337, %v337
    %v340 = vlaneseq
    %v341 = vshrl.u32 %v340, 7
    %v342 = vsub.s32 0, %v341
    %v343 = vrot.slane %v330, %v342
    %v344 = vlaneseq
    %v345 = vshrl.u32 %v344, 7
    %v346 = vsub.s32 0, %v345
    %v347 = vrot.slane %v337, %v346
    %v348 = vlaneseq
    %v349 = vshrl.u32 %v348, 7
    %v350 = vsub.s32 0, %v349
    %v351 = vrot.slane %v338, %v350
    %v352 = vlaneseq
    %v353 = vshrl.u32 %v352, 7
    %v354 = vsub.s32 0, %v353
    %v355 = vrot.slane %v339, %v354
    %v360 = vadd.f32 %v277, %v343
    %v361 = vadd.f32 %v281, %v343
    %v362 = vadd.f32 %v288, %v347
    %v363 = vadd.f32 %v292, %v347
    %v364 = vadd.f32 %v299, %v351
    %v365 = vadd.f32 %v303, %v351
    %v366 = vadd.f32 %v310, %v355
    %v367 = vadd.f32 %v314, %v355
    %vm368 = vcmp.gt.f32.partialorder %v360, 0.0
    %vm369 = vcmp.gt.f32.partialorder %v361, 0.0
    %vm370 = vcmp.gt.f32.partialorder %v362, 0.0
    %vm371 = vcmp.gt.f32.partialorder %v363, 0.0
    %vm372 = vcmp.gt.f32.partialorder %v364, 0.0
    %vm373 = vcmp.gt.f32.partialorder %v365, 0.0
    %vm374 = vcmp.gt.f32.partialorder %v366, 0.0
    %vm375 = vcmp.gt.f32.partialorder %v367, 0.0
    %v376 = vmul.f32 %v360, 0.2
    %v377 = vmul.f32 %v361, 0.2
    %v378 = vmul.f32 %v362, 0.2
    %v379 = vmul.f32 %v363, 0.2
    %v380 = vmul.f32 %v364, 0.2
    %v381 = vmul.f32 %v365, 0.2
    %v382 = vmul.f32 %v366, 0.2
    %v383 = vmul.f32 %v367, 0.2
    %v384 = vsel %vm368, %v360, %v376
    %v385 = vsel %vm369, %v361, %v377
    %v386 = vsel %vm370, %v362, %v378
    %v387 = vsel %vm371, %v363, %v379
    %v388 = vsel %vm372, %v364, %v380
    %v389 = vsel %vm373, %v365, %v381
    %v390 = vsel %vm374, %v366, %v382
    %v391 = vsel %vm375, %v367, %v383
    %v392 = vsub.f32 %v29, 1.0
    %v393 = vsub.f32 %v30, 1.0
    %v394 = vmul.f32 %v392, 1e+30
    %v395 = vmul.f32 %v393, 1e+30
    %v396 = vadd.f32 %v384, %v394
    %v397 = vadd.f32 %v385, %v395
    %v398 = vadd.f32 %v386, %v394
    %v399 = vadd.f32 %v387, %v395
    %v400 = vadd.f32 %v388, %v394
    %v401 = vadd.f32 %v389, %v395
    %v402 = vadd.f32 %v390, %v394
    %v403 = vadd.f32 %v391, %v395
    %vm404 = vcmask 130048
    %v405 = vsel %vm404, %v396, -inf
    %406 = vmax.xlane.f32.xlu0 %v405
    %v407 = vpop.xlane.xlu0 %406
    %v408 = vsel %vm404, %v397, -inf
    %409 = vmax.xlane.f32.xlu0 %v408
    %v410 = vpop.xlane.xlu0 %409
    %v411 = vsel %vm404, %v398, -inf
    %412 = vmax.xlane.f32.xlu0 %v411
    %v413 = vpop.xlane.xlu0 %412
    %v414 = vsel %vm404, %v399, -inf
    %415 = vmax.xlane.f32.xlu0 %v414
    %v416 = vpop.xlane.xlu0 %415
    %v417 = vsel %vm404, %v400, -inf
    %418 = vmax.xlane.f32.xlu0 %v417
    %v419 = vpop.xlane.xlu0 %418
    %v420 = vsel %vm404, %v401, -inf
    %421 = vmax.xlane.f32.xlu0 %v420
    %v422 = vpop.xlane.xlu0 %421
    %v423 = vsel %vm404, %v402, -inf
    %424 = vmax.xlane.f32.xlu0 %v423
    %v425 = vpop.xlane.xlu0 %424
    %v426 = vsel %vm404, %v403, -inf
    %427 = vmax.xlane.f32.xlu0 %v426
    %v428 = vpop.xlane.xlu0 %427
    %v429 = vsub.f32 %v396, %v407
    %v430 = vsub.f32 %v397, %v410
    %v431 = vsub.f32 %v398, %v413
    %v432 = vsub.f32 %v399, %v416
    %v433 = vsub.f32 %v400, %v419
    %v434 = vsub.f32 %v401, %v422
    %v435 = vsub.f32 %v402, %v425
    %v436 = vsub.f32 %v403, %v428
    %v437 = vmul.f32 %v429, 1.442695
    %v438 = vpow.pop %v437
    %v439 = vmul.f32 %v430, 1.442695
    %v440 = vpow.pop %v439
    %v441 = vmul.f32 %v431, 1.442695
    %v442 = vpow.pop %v441
    %v443 = vmul.f32 %v432, 1.442695
    %v444 = vpow.pop %v443
    %v445 = vmul.f32 %v433, 1.442695
    %v446 = vpow.pop %v445
    %v447 = vmul.f32 %v434, 1.442695
    %v448 = vpow.pop %v447
    %v449 = vmul.f32 %v435, 1.442695
    %v450 = vpow.pop %v449
    %v451 = vmul.f32 %v436, 1.442695
    %v452 = vpow.pop %v451
    %v453 = vsel %vm404, %v438, 0.0
    %454 = vadd.xlane.f32.xlu0 %v453
    %v455 = vpop.xlane.xlu0 %454
    %v456 = vsel %vm404, %v440, 0.0
    %457 = vadd.xlane.f32.xlu0 %v456
    %v458 = vpop.xlane.xlu0 %457
    %v459 = vsel %vm404, %v442, 0.0
    %460 = vadd.xlane.f32.xlu0 %v459
    %v461 = vpop.xlane.xlu0 %460
    %v462 = vsel %vm404, %v444, 0.0
    %463 = vadd.xlane.f32.xlu0 %v462
    %v464 = vpop.xlane.xlu0 %463
    %v465 = vsel %vm404, %v446, 0.0
    %466 = vadd.xlane.f32.xlu0 %v465
    %v467 = vpop.xlane.xlu0 %466
    %v468 = vsel %vm404, %v448, 0.0
    %469 = vadd.xlane.f32.xlu0 %v468
    %v470 = vpop.xlane.xlu0 %469
    %v471 = vsel %vm404, %v450, 0.0
    %472 = vadd.xlane.f32.xlu0 %v471
    %v473 = vpop.xlane.xlu0 %472
    %v474 = vsel %vm404, %v452, 0.0
    %475 = vadd.xlane.f32.xlu0 %v474
    %v476 = vpop.xlane.xlu0 %475
    %v477 = vrcp.pop %v455
    %v478 = vrcp.pop %v458
    %v479 = vrcp.pop %v461
    %v480 = vrcp.pop %v464
    %v481 = vrcp.pop %v467
    %v482 = vrcp.pop %v470
    %v483 = vrcp.pop %v473
    %v484 = vrcp.pop %v476
    %v485 = vmul.f32 %v438, %v477
    %v486 = vmul.f32 %v440, %v478
    %v487 = vmul.f32 %v442, %v479
    %v488 = vmul.f32 %v444, %v480
    %v489 = vmul.f32 %v446, %v481
    %v490 = vmul.f32 %v448, %v482
    %v491 = vmul.f32 %v450, %v483
    %v492 = vmul.f32 %v452, %v484
    %v493 = vld [vmem:[%s5] sm:$0xff]
    %vm494 = vcmask 64512
    %v495 = vsel %vm494, %v109, 0
    %v497 = vsel %vm494, %v114, 0
    %499 = vmatprep.subr.mxu0 0.0
    %500 = vmatpush1.msra.mxu0 %v493
    %501 = vmatprep.subr.mxu0 0.0
    %502 = vmatpush1.msra.mxu0 0.0
    %503 = vmatprep.subr.mxu0 0.0
    %504 = vmatpush1.msra.mxu0 0.0
    %505 = vmatprep.subr.mxu0 0.0
    %506 = vmatpush1.msra.mxu0 0.0
    %507 = vmatprep.subr.mxu0 0.0
    %508 = vmatpush1.msra.mxu0 0.0
    %509 = vmatprep.subr.mxu0 0.0
    %510 = vmatpush1.msra.mxu0 0.0
    %511 = vmatprep.subr.mxu0 0.0
    %512 = vmatpush1.msra.mxu0 0.0
    %513 = vmatprep.subr.mxu0 0.0
    %514 = vmatpush1.msra.mxu0 0.0
    %515 = vmatprep.subr.mxu0 0.0
    %516 = vmatpush1.msra.mxu0 0.0
    %517 = vmatprep.subr.mxu0 0.0
    %518 = vmatpush1.msra.mxu0 0.0
    %519 = vmatprep.subr.mxu0 0.0
    %520 = vmatpush1.msra.mxu0 0.0
    %521 = vmatprep.subr.mxu0 0.0
    %522 = vmatpush1.msra.mxu0 0.0
    %523 = vmatprep.subr.mxu0 0.0
    %524 = vmatpush1.msra.mxu0 0.0
    %525 = vmatprep.subr.mxu0 0.0
    %526 = vmatpush1.msra.mxu0 0.0
    %527 = vmatprep.subr.mxu0 0.0
    %528 = vmatpush1.msra.mxu0 0.0
    %529 = vmatprep.subr.mxu0 0.0
    %530 = vmatpush1.msra.mxu0 0.0
    %531 = vmatprep.subr.mxu0 0.0
    %532 = vmatpush1.msra.mxu0 0.0
    %533 = vmatprep.subr.mxu0 0.0
    %534 = vmatpush1.msra.mxu0 0.0
    %535 = vmatprep.subr.mxu0 0.0
    %536 = vmatpush1.msra.mxu0 0.0
    %537 = vmatprep.subr.mxu0 0.0
    %538 = vmatpush1.msra.mxu0 0.0
    %539 = vmatprep.subr.mxu0 0.0
    %540 = vmatpush1.msra.mxu0 0.0
    %541 = vmatprep.subr.mxu0 0.0
    %542 = vmatpush1.msra.mxu0 0.0
    %543 = vmatprep.subr.mxu0 0.0
    %544 = vmatpush1.msra.mxu0 0.0
    %545 = vmatprep.subr.mxu0 0.0
    %546 = vmatpush1.msra.mxu0 0.0
    %547 = vmatprep.subr.mxu0 0.0
    %548 = vmatpush1.msra.mxu0 0.0
    %549 = vmatprep.subr.mxu0 0.0
    %550 = vmatpush1.msra.mxu0 0.0
    %551 = vmatprep.subr.mxu0 0.0
    %552 = vmatpush1.msra.mxu0 0.0
    %553 = vmatprep.subr.mxu0 0.0
    %554 = vmatpush1.msra.mxu0 0.0
    %555 = vmatprep.subr.mxu0 0.0
    %556 = vmatpush1.msra.mxu0 0.0
    %557 = vmatprep.subr.mxu0 0.0
    %558 = vmatpush1.msra.mxu0 0.0
    %559 = vmatprep.subr.mxu0 0.0
    %560 = vmatpush1.msra.mxu0 0.0
    %561 = vmatprep.subr.mxu0 0.0
    %562 = vmatpush1.msra.mxu0 0.0
    %563 = vmatprep.mubr.f32.mxu0 0.0
    %564 = vmatmul.mubr.f32.gmra.mrb[0].mxu0 %v495
    %v565 = vpop.f32.mrb[0].mxu0
    %v566 = vadd.f32 0.0, %v565
    %v567 = vpop.f32.mrb[0].mxu0
    %568 = vmatprep.mubr.f32.mxu0 0.0
    %569 = vmatmul.mubr.f32.gmra.mrb[0].mxu0 %v497
    %v570 = vpop.f32.mrb[0].mxu0
    %v571 = vadd.f32 0.0, %v570
    %v572 = vpop.f32.mrb[0].mxu0
    %573 = vdwg.mxu0
    %s574 = scalar_lea.vmem %s5, 8
    %v575 = vld [vmem:[%s574] sm:$0xff]
    %576 = vrot.lane.b32.xlu0 %v109, 120
    %v577 = vpop.permute.xlu0 %576
    %578 = vrot.lane.b32.xlu0 %v114, 120
    %v579 = vpop.permute.xlu0 %578
    %v580 = vsel %vm494, %v577, 0
    %v582 = vsel %vm494, %v579, 0
    %584 = vmatprep.subr.mxu0 0.0
    %585 = vmatpush1.msra.mxu0 %v575
    %586 = vmatprep.subr.mxu0 0.0
    %587 = vmatpush1.msra.mxu0 0.0
    %588 = vmatprep.subr.mxu0 0.0
    %589 = vmatpush1.msra.mxu0 0.0
    %590 = vmatprep.subr.mxu0 0.0
    %591 = vmatpush1.msra.mxu0 0.0
    %592 = vmatprep.subr.mxu0 0.0
    %593 = vmatpush1.msra.mxu0 0.0
    %594 = vmatprep.subr.mxu0 0.0
    %595 = vmatpush1.msra.mxu0 0.0
    %596 = vmatprep.subr.mxu0 0.0
    %597 = vmatpush1.msra.mxu0 0.0
    %598 = vmatprep.subr.mxu0 0.0
    %599 = vmatpush1.msra.mxu0 0.0
    %600 = vmatprep.subr.mxu0 0.0
    %601 = vmatpush1.msra.mxu0 0.0
    %602 = vmatprep.subr.mxu0 0.0
    %603 = vmatpush1.msra.mxu0 0.0
    %604 = vmatprep.subr.mxu0 0.0
    %605 = vmatpush1.msra.mxu0 0.0
    %606 = vmatprep.subr.mxu0 0.0
    %607 = vmatpush1.msra.mxu0 0.0
    %608 = vmatprep.subr.mxu0 0.0
    %609 = vmatpush1.msra.mxu0 0.0
    %610 = vmatprep.subr.mxu0 0.0
    %611 = vmatpush1.msra.mxu0 0.0
    %612 = vmatprep.subr.mxu0 0.0
    %613 = vmatpush1.msra.mxu0 0.0
    %614 = vmatprep.subr.mxu0 0.0
    %615 = vmatpush1.msra.mxu0 0.0
    %616 = vmatprep.subr.mxu0 0.0
    %617 = vmatpush1.msra.mxu0 0.0
    %618 = vmatprep.subr.mxu0 0.0
    %619 = vmatpush1.msra.mxu0 0.0
    %620 = vmatprep.subr.mxu0 0.0
    %621 = vmatpush1.msra.mxu0 0.0
    %622 = vmatprep.subr.mxu0 0.0
    %623 = vmatpush1.msra.mxu0 0.0
    %624 = vmatprep.subr.mxu0 0.0
    %625 = vmatpush1.msra.mxu0 0.0
    %626 = vmatprep.subr.mxu0 0.0
    %627 = vmatpush1.msra.mxu0 0.0
    %628 = vmatprep.subr.mxu0 0.0
    %629 = vmatpush1.msra.mxu0 0.0
    %630 = vmatprep.subr.mxu0 0.0
    %631 = vmatpush1.msra.mxu0 0.0
    %632 = vmatprep.subr.mxu0 0.0
    %633 = vmatpush1.msra.mxu0 0.0
    %634 = vmatprep.subr.mxu0 0.0
    %635 = vmatpush1.msra.mxu0 0.0
    %636 = vmatprep.subr.mxu0 0.0
    %637 = vmatpush1.msra.mxu0 0.0
    %638 = vmatprep.subr.mxu0 0.0
    %639 = vmatpush1.msra.mxu0 0.0
    %640 = vmatprep.subr.mxu0 0.0
    %641 = vmatpush1.msra.mxu0 0.0
    %642 = vmatprep.subr.mxu0 0.0
    %643 = vmatpush1.msra.mxu0 0.0
    %644 = vmatprep.subr.mxu0 0.0
    %645 = vmatpush1.msra.mxu0 0.0
    %646 = vmatprep.subr.mxu0 0.0
    %647 = vmatpush1.msra.mxu0 0.0
    %648 = vmatprep.mubr.f32.mxu0 0.0
    %649 = vmatmul.mubr.f32.gmra.mrb[0].mxu0 %v580
    %v650 = vpop.f32.mrb[0].mxu0
    %v651 = vadd.f32 0.0, %v650
    %v652 = vpop.f32.mrb[0].mxu0
    %653 = vmatprep.mubr.f32.mxu0 0.0
    %654 = vmatmul.mubr.f32.gmra.mrb[0].mxu0 %v582
    %v655 = vpop.f32.mrb[0].mxu0
    %v656 = vadd.f32 0.0, %v655
    %v657 = vpop.f32.mrb[0].mxu0
    %658 = vdwg.mxu0
    %v660 = vsel %vm404, %v487, 0
    %v663 = vsel %vm404, %v488, 0
    %665 = vmatprep.subr.mxu0 0.0
    %666 = vmatpush1.msra.mxu0 %v651
    %667 = vmatprep.subr.mxu0 0.0
    %668 = vmatpush1.msra.mxu0 %v656
    %669 = vmatprep.subr.mxu0 0.0
    %670 = vmatpush1.msra.mxu0 0.0
    %671 = vmatprep.subr.mxu0 0.0
    %672 = vmatpush1.msra.mxu0 0.0
    %673 = vmatprep.subr.mxu0 0.0
    %674 = vmatpush1.msra.mxu0 0.0
    %675 = vmatprep.subr.mxu0 0.0
    %676 = vmatpush1.msra.mxu0 0.0
    %677 = vmatprep.subr.mxu0 0.0
    %678 = vmatpush1.msra.mxu0 0.0
    %679 = vmatprep.subr.mxu0 0.0
    %680 = vmatpush1.msra.mxu0 0.0
    %681 = vmatprep.subr.mxu0 0.0
    %682 = vmatpush1.msra.mxu0 0.0
    %683 = vmatprep.subr.mxu0 0.0
    %684 = vmatpush1.msra.mxu0 0.0
    %685 = vmatprep.subr.mxu0 0.0
    %686 = vmatpush1.msra.mxu0 0.0
    %687 = vmatprep.subr.mxu0 0.0
    %688 = vmatpush1.msra.mxu0 0.0
    %689 = vmatprep.subr.mxu0 0.0
    %690 = vmatpush1.msra.mxu0 0.0
    %691 = vmatprep.subr.mxu0 0.0
    %692 = vmatpush1.msra.mxu0 0.0
    %693 = vmatprep.subr.mxu0 0.0
    %694 = vmatpush1.msra.mxu0 0.0
    %695 = vmatprep.subr.mxu0 0.0
    %696 = vmatpush1.msra.mxu0 0.0
    %697 = vmatprep.subr.mxu0 0.0
    %698 = vmatpush1.msra.mxu0 0.0
    %699 = vmatprep.subr.mxu0 0.0
    %700 = vmatpush1.msra.mxu0 0.0
    %701 = vmatprep.subr.mxu0 0.0
    %702 = vmatpush1.msra.mxu0 0.0
    %703 = vmatprep.subr.mxu0 0.0
    %704 = vmatpush1.msra.mxu0 0.0
    %705 = vmatprep.subr.mxu0 0.0
    %706 = vmatpush1.msra.mxu0 0.0
    %707 = vmatprep.subr.mxu0 0.0
    %708 = vmatpush1.msra.mxu0 0.0
    %709 = vmatprep.subr.mxu0 0.0
    %710 = vmatpush1.msra.mxu0 0.0
    %711 = vmatprep.subr.mxu0 0.0
    %712 = vmatpush1.msra.mxu0 0.0
    %713 = vmatprep.subr.mxu0 0.0
    %714 = vmatpush1.msra.mxu0 0.0
    %715 = vmatprep.subr.mxu0 0.0
    %716 = vmatpush1.msra.mxu0 0.0
    %717 = vmatprep.subr.mxu0 0.0
    %718 = vmatpush1.msra.mxu0 0.0
    %719 = vmatprep.subr.mxu0 0.0
    %720 = vmatpush1.msra.mxu0 0.0
    %721 = vmatprep.subr.mxu0 0.0
    %722 = vmatpush1.msra.mxu0 0.0
    %723 = vmatprep.subr.mxu0 0.0
    %724 = vmatpush1.msra.mxu0 0.0
    %725 = vmatprep.subr.mxu0 0.0
    %726 = vmatpush1.msra.mxu0 0.0
    %727 = vmatprep.subr.mxu0 0.0
    %728 = vmatpush1.msra.mxu0 0.0
    %729 = vmatprep.mubr.f32.mxu0 0.0
    %730 = vmatmul.mubr.f32.gmra.mrb[0].mxu0 %v660
    %v731 = vpop.f32.mrb[0].mxu0
    %v732 = vadd.f32 0.0, %v731
    %v733 = vpop.f32.mrb[0].mxu0
    %734 = vmatprep.mubr.f32.mxu0 0.0
    %735 = vmatmul.mubr.f32.gmra.mrb[0].mxu0 %v663
    %v736 = vpop.f32.mrb[0].mxu0
    %v737 = vadd.f32 0.0, %v736
    %v738 = vpop.f32.mrb[0].mxu0
    %739 = vdwg.mxu0
    %v741 = vsel %vm404, %v485, 0
    %v744 = vsel %vm404, %v486, 0
    %746 = vmatprep.subr.mxu0 0.0
    %747 = vmatpush1.msra.mxu0 %v566
    %748 = vmatprep.subr.mxu0 0.0
    %749 = vmatpush1.msra.mxu0 %v571
    %750 = vmatprep.subr.mxu0 0.0
    %751 = vmatpush1.msra.mxu0 0.0
    %752 = vmatprep.subr.mxu0 0.0
    %753 = vmatpush1.msra.mxu0 0.0
    %754 = vmatprep.subr.mxu0 0.0
    %755 = vmatpush1.msra.mxu0 0.0
    %756 = vmatprep.subr.mxu0 0.0
    %757 = vmatpush1.msra.mxu0 0.0
    %758 = vmatprep.subr.mxu0 0.0
    %759 = vmatpush1.msra.mxu0 0.0
    %760 = vmatprep.subr.mxu0 0.0
    %761 = vmatpush1.msra.mxu0 0.0
    %762 = vmatprep.subr.mxu0 0.0
    %763 = vmatpush1.msra.mxu0 0.0
    %764 = vmatprep.subr.mxu0 0.0
    %765 = vmatpush1.msra.mxu0 0.0
    %766 = vmatprep.subr.mxu0 0.0
    %767 = vmatpush1.msra.mxu0 0.0
    %768 = vmatprep.subr.mxu0 0.0
    %769 = vmatpush1.msra.mxu0 0.0
    %770 = vmatprep.subr.mxu0 0.0
    %771 = vmatpush1.msra.mxu0 0.0
    %772 = vmatprep.subr.mxu0 0.0
    %773 = vmatpush1.msra.mxu0 0.0
    %774 = vmatprep.subr.mxu0 0.0
    %775 = vmatpush1.msra.mxu0 0.0
    %776 = vmatprep.subr.mxu0 0.0
    %777 = vmatpush1.msra.mxu0 0.0
    %778 = vmatprep.subr.mxu0 0.0
    %779 = vmatpush1.msra.mxu0 0.0
    %780 = vmatprep.subr.mxu0 0.0
    %781 = vmatpush1.msra.mxu0 0.0
    %782 = vmatprep.subr.mxu0 0.0
    %783 = vmatpush1.msra.mxu0 0.0
    %784 = vmatprep.subr.mxu0 0.0
    %785 = vmatpush1.msra.mxu0 0.0
    %786 = vmatprep.subr.mxu0 0.0
    %787 = vmatpush1.msra.mxu0 0.0
    %788 = vmatprep.subr.mxu0 0.0
    %789 = vmatpush1.msra.mxu0 0.0
    %790 = vmatprep.subr.mxu0 0.0
    %791 = vmatpush1.msra.mxu0 0.0
    %792 = vmatprep.subr.mxu0 0.0
    %793 = vmatpush1.msra.mxu0 0.0
    %794 = vmatprep.subr.mxu0 0.0
    %795 = vmatpush1.msra.mxu0 0.0
    %796 = vmatprep.subr.mxu0 0.0
    %797 = vmatpush1.msra.mxu0 0.0
    %798 = vmatprep.subr.mxu0 0.0
    %799 = vmatpush1.msra.mxu0 0.0
    %800 = vmatprep.subr.mxu0 0.0
    %801 = vmatpush1.msra.mxu0 0.0
    %802 = vmatprep.subr.mxu0 0.0
    %803 = vmatpush1.msra.mxu0 0.0
    %804 = vmatprep.subr.mxu0 0.0
    %805 = vmatpush1.msra.mxu0 0.0
    %806 = vmatprep.subr.mxu0 0.0
    %807 = vmatpush1.msra.mxu0 0.0
    %808 = vmatprep.subr.mxu0 0.0
    %809 = vmatpush1.msra.mxu0 0.0
    %810 = vmatprep.mubr.f32.mxu0 0.0
    %811 = vmatmul.mubr.f32.gmra.mrb[0].mxu0 %v741
    %v812 = vpop.f32.mrb[0].mxu0
    %v813 = vadd.f32 %v732, %v812
    %v814 = vpop.f32.mrb[0].mxu0
    %815 = vmatprep.mubr.f32.mxu0 0.0
    %816 = vmatmul.mubr.f32.gmra.mrb[0].mxu0 %v744
    %v817 = vpop.f32.mrb[0].mxu0
    %v818 = vadd.f32 %v737, %v817
    %v819 = vpop.f32.mrb[0].mxu0
    %820 = vdwg.mxu0
    %s821 = scalar_lea.vmem %s5, 16
    %v822 = vld [vmem:[%s821] sm:$0xff]
    %823 = vrot.lane.b32.xlu0 %v109, 112
    %v824 = vpop.permute.xlu0 %823
    %825 = vrot.lane.b32.xlu0 %v114, 112
    %v826 = vpop.permute.xlu0 %825
    %v827 = vsel %vm494, %v824, 0
    %v829 = vsel %vm494, %v826, 0
    %831 = vmatprep.subr.mxu0 0.0
    %832 = vmatpush1.msra.mxu0 %v822
    %833 = vmatprep.subr.mxu0 0.0
    %834 = vmatpush1.msra.mxu0 0.0
    %835 = vmatprep.subr.mxu0 0.0
    %836 = vmatpush1.msra.mxu0 0.0
    %837 = vmatprep.subr.mxu0 0.0
    %838 = vmatpush1.msra.mxu0 0.0
    %839 = vmatprep.subr.mxu0 0.0
    %840 = vmatpush1.msra.mxu0 0.0
    %841 = vmatprep.subr.mxu0 0.0
    %842 = vmatpush1.msra.mxu0 0.0
    %843 = vmatprep.subr.mxu0 0.0
    %844 = vmatpush1.msra.mxu0 0.0
    %845 = vmatprep.subr.mxu0 0.0
    %846 = vmatpush1.msra.mxu0 0.0
    %847 = vmatprep.subr.mxu0 0.0
    %848 = vmatpush1.msra.mxu0 0.0
    %849 = vmatprep.subr.mxu0 0.0
    %850 = vmatpush1.msra.mxu0 0.0
    %851 = vmatprep.subr.mxu0 0.0
    %852 = vmatpush1.msra.mxu0 0.0
    %853 = vmatprep.subr.mxu0 0.0
    %854 = vmatpush1.msra.mxu0 0.0
    %855 = vmatprep.subr.mxu0 0.0
    %856 = vmatpush1.msra.mxu0 0.0
    %857 = vmatprep.subr.mxu0 0.0
    %858 = vmatpush1.msra.mxu0 0.0
    %859 = vmatprep.subr.mxu0 0.0
    %860 = vmatpush1.msra.mxu0 0.0
    %861 = vmatprep.subr.mxu0 0.0
    %862 = vmatpush1.msra.mxu0 0.0
    %863 = vmatprep.subr.mxu0 0.0
    %864 = vmatpush1.msra.mxu0 0.0
    %865 = vmatprep.subr.mxu0 0.0
    %866 = vmatpush1.msra.mxu0 0.0
    %867 = vmatprep.subr.mxu0 0.0
    %868 = vmatpush1.msra.mxu0 0.0
    %869 = vmatprep.subr.mxu0 0.0
    %870 = vmatpush1.msra.mxu0 0.0
    %871 = vmatprep.subr.mxu0 0.0
    %872 = vmatpush1.msra.mxu0 0.0
    %873 = vmatprep.subr.mxu0 0.0
    %874 = vmatpush1.msra.mxu0 0.0
    %875 = vmatprep.subr.mxu0 0.0
    %876 = vmatpush1.msra.mxu0 0.0
    %877 = vmatprep.subr.mxu0 0.0
    %878 = vmatpush1.msra.mxu0 0.0
    %879 = vmatprep.subr.mxu0 0.0
    %880 = vmatpush1.msra.mxu0 0.0
    %881 = vmatprep.subr.mxu0 0.0
    %882 = vmatpush1.msra.mxu0 0.0
    %883 = vmatprep.subr.mxu0 0.0
    %884 = vmatpush1.msra.mxu0 0.0
    %885 = vmatprep.subr.mxu0 0.0
    %886 = vmatpush1.msra.mxu0 0.0
    %887 = vmatprep.subr.mxu0 0.0
    %888 = vmatpush1.msra.mxu0 0.0
    %889 = vmatprep.subr.mxu0 0.0
    %890 = vmatpush1.msra.mxu0 0.0
    %891 = vmatprep.subr.mxu0 0.0
    %892 = vmatpush1.msra.mxu0 0.0
    %893 = vmatprep.subr.mxu0 0.0
    %894 = vmatpush1.msra.mxu0 0.0
    %895 = vmatprep.mubr.f32.mxu0 0.0
    %896 = vmatmul.mubr.f32.gmra.mrb[0].mxu0 %v827
    %v897 = vpop.f32.mrb[0].mxu0
    %v898 = vadd.f32 0.0, %v897
    %v899 = vpop.f32.mrb[0].mxu0
    %900 = vmatprep.mubr.f32.mxu0 0.0
    %901 = vmatmul.mubr.f32.gmra.mrb[0].mxu0 %v829
    %v902 = vpop.f32.mrb[0].mxu0
    %v903 = vadd.f32 0.0, %v902
    %v904 = vpop.f32.mrb[0].mxu0
    %905 = vdwg.mxu0
    %v907 = vsel %vm404, %v489, 0
    %v910 = vsel %vm404, %v490, 0
    %912 = vmatprep.subr.mxu0 0.0
    %913 = vmatpush1.msra.mxu0 %v898
    %914 = vmatprep.subr.mxu0 0.0
    %915 = vmatpush1.msra.mxu0 %v903
    %916 = vmatprep.subr.mxu0 0.0
    %917 = vmatpush1.msra.mxu0 0.0
    %918 = vmatprep.subr.mxu0 0.0
    %919 = vmatpush1.msra.mxu0 0.0
    %920 = vmatprep.subr.mxu0 0.0
    %921 = vmatpush1.msra.mxu0 0.0
    %922 = vmatprep.subr.mxu0 0.0
    %923 = vmatpush1.msra.mxu0 0.0
    %924 = vmatprep.subr.mxu0 0.0
    %925 = vmatpush1.msra.mxu0 0.0
    %926 = vmatprep.subr.mxu0 0.0
    %927 = vmatpush1.msra.mxu0 0.0
    %928 = vmatprep.subr.mxu0 0.0
    %929 = vmatpush1.msra.mxu0 0.0
    %930 = vmatprep.subr.mxu0 0.0
    %931 = vmatpush1.msra.mxu0 0.0
    %932 = vmatprep.subr.mxu0 0.0
    %933 = vmatpush1.msra.mxu0 0.0
    %934 = vmatprep.subr.mxu0 0.0
    %935 = vmatpush1.msra.mxu0 0.0
    %936 = vmatprep.subr.mxu0 0.0
    %937 = vmatpush1.msra.mxu0 0.0
    %938 = vmatprep.subr.mxu0 0.0
    %939 = vmatpush1.msra.mxu0 0.0
    %940 = vmatprep.subr.mxu0 0.0
    %941 = vmatpush1.msra.mxu0 0.0
    %942 = vmatprep.subr.mxu0 0.0
    %943 = vmatpush1.msra.mxu0 0.0
    %944 = vmatprep.subr.mxu0 0.0
    %945 = vmatpush1.msra.mxu0 0.0
    %946 = vmatprep.subr.mxu0 0.0
    %947 = vmatpush1.msra.mxu0 0.0
    %948 = vmatprep.subr.mxu0 0.0
    %949 = vmatpush1.msra.mxu0 0.0
    %950 = vmatprep.subr.mxu0 0.0
    %951 = vmatpush1.msra.mxu0 0.0
    %952 = vmatprep.subr.mxu0 0.0
    %953 = vmatpush1.msra.mxu0 0.0
    %954 = vmatprep.subr.mxu0 0.0
    %955 = vmatpush1.msra.mxu0 0.0
    %956 = vmatprep.subr.mxu0 0.0
    %957 = vmatpush1.msra.mxu0 0.0
    %958 = vmatprep.subr.mxu0 0.0
    %959 = vmatpush1.msra.mxu0 0.0
    %960 = vmatprep.subr.mxu0 0.0
    %961 = vmatpush1.msra.mxu0 0.0
    %962 = vmatprep.subr.mxu0 0.0
    %963 = vmatpush1.msra.mxu0 0.0
    %964 = vmatprep.subr.mxu0 0.0
    %965 = vmatpush1.msra.mxu0 0.0
    %966 = vmatprep.subr.mxu0 0.0
    %967 = vmatpush1.msra.mxu0 0.0
    %968 = vmatprep.subr.mxu0 0.0
    %969 = vmatpush1.msra.mxu0 0.0
    %970 = vmatprep.subr.mxu0 0.0
    %971 = vmatpush1.msra.mxu0 0.0
    %972 = vmatprep.subr.mxu0 0.0
    %973 = vmatpush1.msra.mxu0 0.0
    %974 = vmatprep.subr.mxu0 0.0
    %975 = vmatpush1.msra.mxu0 0.0
    %976 = vmatprep.mubr.f32.mxu0 0.0
    %977 = vmatmul.mubr.f32.gmra.mrb[0].mxu0 %v907
    %v978 = vpop.f32.mrb[0].mxu0
    %v979 = vadd.f32 0.0, %v978
    %v980 = vpop.f32.mrb[0].mxu0
    %981 = vmatprep.mubr.f32.mxu0 0.0
    %982 = vmatmul.mubr.f32.gmra.mrb[0].mxu0 %v910
    %v983 = vpop.f32.mrb[0].mxu0
    %v984 = vadd.f32 0.0, %v983
    %v985 = vpop.f32.mrb[0].mxu0
    %986 = vdwg.mxu0
    %v987 = vadd.f32 %v813, %v979
    %v988 = vadd.f32 %v818, %v984
    %s989 = scalar_lea.vmem %s5, 24
    %v990 = vld [vmem:[%s989] sm:$0xff]
    %991 = vrot.lane.b32.xlu0 %v109, 104
    %v992 = vpop.permute.xlu0 %991
    %993 = vrot.lane.b32.xlu0 %v114, 104
    %v994 = vpop.permute.xlu0 %993
    %v995 = vsel %vm494, %v992, 0
    %v997 = vsel %vm494, %v994, 0
    %999 = vmatprep.subr.mxu0 0.0
    %1000 = vmatpush1.msra.mxu0 %v990
    %1001 = vmatprep.subr.mxu0 0.0
    %1002 = vmatpush1.msra.mxu0 0.0
    %1003 = vmatprep.subr.mxu0 0.0
    %1004 = vmatpush1.msra.mxu0 0.0
    %1005 = vmatprep.subr.mxu0 0.0
    %1006 = vmatpush1.msra.mxu0 0.0
    %1007 = vmatprep.subr.mxu0 0.0
    %1008 = vmatpush1.msra.mxu0 0.0
    %1009 = vmatprep.subr.mxu0 0.0
    %1010 = vmatpush1.msra.mxu0 0.0
    %1011 = vmatprep.subr.mxu0 0.0
    %1012 = vmatpush1.msra.mxu0 0.0
    %1013 = vmatprep.subr.mxu0 0.0
    %1014 = vmatpush1.msra.mxu0 0.0
    %1015 = vmatprep.subr.mxu0 0.0
    %1016 = vmatpush1.msra.mxu0 0.0
    %1017 = vmatprep.subr.mxu0 0.0
    %1018 = vmatpush1.msra.mxu0 0.0
    %1019 = vmatprep.subr.mxu0 0.0
    %1020 = vmatpush1.msra.mxu0 0.0
    %1021 = vmatprep.subr.mxu0 0.0
    %1022 = vmatpush1.msra.mxu0 0.0
    %1023 = vmatprep.subr.mxu0 0.0
    %1024 = vmatpush1.msra.mxu0 0.0
    %1025 = vmatprep.subr.mxu0 0.0
    %1026 = vmatpush1.msra.mxu0 0.0
    %1027 = vmatprep.subr.mxu0 0.0
    %1028 = vmatpush1.msra.mxu0 0.0
    %1029 = vmatprep.subr.mxu0 0.0
    %1030 = vmatpush1.msra.mxu0 0.0
    %1031 = vmatprep.subr.mxu0 0.0
    %1032 = vmatpush1.msra.mxu0 0.0
    %1033 = vmatprep.subr.mxu0 0.0
    %1034 = vmatpush1.msra.mxu0 0.0
    %1035 = vmatprep.subr.mxu0 0.0
    %1036 = vmatpush1.msra.mxu0 0.0
    %1037 = vmatprep.subr.mxu0 0.0
    %1038 = vmatpush1.msra.mxu0 0.0
    %1039 = vmatprep.subr.mxu0 0.0
    %1040 = vmatpush1.msra.mxu0 0.0
    %1041 = vmatprep.subr.mxu0 0.0
    %1042 = vmatpush1.msra.mxu0 0.0
    %1043 = vmatprep.subr.mxu0 0.0
    %1044 = vmatpush1.msra.mxu0 0.0
    %1045 = vmatprep.subr.mxu0 0.0
    %1046 = vmatpush1.msra.mxu0 0.0
    %1047 = vmatprep.subr.mxu0 0.0
    %1048 = vmatpush1.msra.mxu0 0.0
    %1049 = vmatprep.subr.mxu0 0.0
    %1050 = vmatpush1.msra.mxu0 0.0
    %1051 = vmatprep.subr.mxu0 0.0
    %1052 = vmatpush1.msra.mxu0 0.0
    %1053 = vmatprep.subr.mxu0 0.0
    %1054 = vmatpush1.msra.mxu0 0.0
    %1055 = vmatprep.subr.mxu0 0.0
    %1056 = vmatpush1.msra.mxu0 0.0
    %1057 = vmatprep.subr.mxu0 0.0
    %1058 = vmatpush1.msra.mxu0 0.0
    %1059 = vmatprep.subr.mxu0 0.0
    %1060 = vmatpush1.msra.mxu0 0.0
    %1061 = vmatprep.subr.mxu0 0.0
    %1062 = vmatpush1.msra.mxu0 0.0
    %1063 = vmatprep.mubr.f32.mxu0 0.0
    %1064 = vmatmul.mubr.f32.gmra.mrb[0].mxu0 %v995
    %v1065 = vpop.f32.mrb[0].mxu0
    %v1066 = vadd.f32 0.0, %v1065
    %v1067 = vpop.f32.mrb[0].mxu0
    %1068 = vmatprep.mubr.f32.mxu0 0.0
    %1069 = vmatmul.mubr.f32.gmra.mrb[0].mxu0 %v997
    %v1070 = vpop.f32.mrb[0].mxu0
    %v1071 = vadd.f32 0.0, %v1070
    %v1072 = vpop.f32.mrb[0].mxu0
    %1073 = vdwg.mxu0
    %v1075 = vsel %vm404, %v491, 0
    %v1078 = vsel %vm404, %v492, 0
    %1080 = vmatprep.subr.mxu0 0.0
    %1081 = vmatpush1.msra.mxu0 %v1066
    %1082 = vmatprep.subr.mxu0 0.0
    %1083 = vmatpush1.msra.mxu0 %v1071
    %1084 = vmatprep.subr.mxu0 0.0
    %1085 = vmatpush1.msra.mxu0 0.0
    %1086 = vmatprep.subr.mxu0 0.0
    %1087 = vmatpush1.msra.mxu0 0.0
    %1088 = vmatprep.subr.mxu0 0.0
    %1089 = vmatpush1.msra.mxu0 0.0
    %1090 = vmatprep.subr.mxu0 0.0
    %1091 = vmatpush1.msra.mxu0 0.0
    %1092 = vmatprep.subr.mxu0 0.0
    %1093 = vmatpush1.msra.mxu0 0.0
    %1094 = vmatprep.subr.mxu0 0.0
    %1095 = vmatpush1.msra.mxu0 0.0
    %1096 = vmatprep.subr.mxu0 0.0
    %1097 = vmatpush1.msra.mxu0 0.0
    %1098 = vmatprep.subr.mxu0 0.0
    %1099 = vmatpush1.msra.mxu0 0.0
    %1100 = vmatprep.subr.mxu0 0.0
    %1101 = vmatpush1.msra.mxu0 0.0
    %1102 = vmatprep.subr.mxu0 0.0
    %1103 = vmatpush1.msra.mxu0 0.0
    %1104 = vmatprep.subr.mxu0 0.0
    %1105 = vmatpush1.msra.mxu0 0.0
    %1106 = vmatprep.subr.mxu0 0.0
    %1107 = vmatpush1.msra.mxu0 0.0
    %1108 = vmatprep.subr.mxu0 0.0
    %1109 = vmatpush1.msra.mxu0 0.0
    %1110 = vmatprep.subr.mxu0 0.0
    %1111 = vmatpush1.msra.mxu0 0.0
    %1112 = vmatprep.subr.mxu0 0.0
    %1113 = vmatpush1.msra.mxu0 0.0
    %1114 = vmatprep.subr.mxu0 0.0
    %1115 = vmatpush1.msra.mxu0 0.0
    %1116 = vmatprep.subr.mxu0 0.0
    %1117 = vmatpush1.msra.mxu0 0.0
    %1118 = vmatprep.subr.mxu0 0.0
    %1119 = vmatpush1.msra.mxu0 0.0
    %1120 = vmatprep.subr.mxu0 0.0
    %1121 = vmatpush1.msra.mxu0 0.0
    %1122 = vmatprep.subr.mxu0 0.0
    %1123 = vmatpush1.msra.mxu0 0.0
    %1124 = vmatprep.subr.mxu0 0.0
    %1125 = vmatpush1.msra.mxu0 0.0
    %1126 = vmatprep.subr.mxu0 0.0
    %1127 = vmatpush1.msra.mxu0 0.0
    %1128 = vmatprep.subr.mxu0 0.0
    %1129 = vmatpush1.msra.mxu0 0.0
    %1130 = vmatprep.subr.mxu0 0.0
    %1131 = vmatpush1.msra.mxu0 0.0
    %1132 = vmatprep.subr.mxu0 0.0
    %1133 = vmatpush1.msra.mxu0 0.0
    %1134 = vmatprep.subr.mxu0 0.0
    %1135 = vmatpush1.msra.mxu0 0.0
    %1136 = vmatprep.subr.mxu0 0.0
    %1137 = vmatpush1.msra.mxu0 0.0
    %1138 = vmatprep.subr.mxu0 0.0
    %1139 = vmatpush1.msra.mxu0 0.0
    %1140 = vmatprep.subr.mxu0 0.0
    %1141 = vmatpush1.msra.mxu0 0.0
    %1142 = vmatprep.subr.mxu0 0.0
    %1143 = vmatpush1.msra.mxu0 0.0
    %1144 = vmatprep.mubr.f32.mxu0 0.0
    %1145 = vmatmul.mubr.f32.gmra.mrb[0].mxu0 %v1075
    %v1146 = vpop.f32.mrb[0].mxu0
    %v1147 = vadd.f32 0.0, %v1146
    %v1148 = vpop.f32.mrb[0].mxu0
    %1149 = vmatprep.mubr.f32.mxu0 0.0
    %1150 = vmatmul.mubr.f32.gmra.mrb[0].mxu0 %v1078
    %v1151 = vpop.f32.mrb[0].mxu0
    %v1152 = vadd.f32 0.0, %v1151
    %v1153 = vpop.f32.mrb[0].mxu0
    %1154 = vdwg.mxu0
    %v1155 = vadd.f32 %v987, %v1147
    %v1156 = vadd.f32 %v988, %v1152
    %v1157 = vld [vmem:[%s6] sm:$0x1]
    %v1159 = vlaneseq
    %v1160 = vshrl.u32 %v1159, 7
    %v1161 = vsub.s32 0, %v1160
    %v1162 = vrot.slane %v1157, %v1161
    %v1164 = vadd.f32 %v1155, %v1162
    %v1165 = vadd.f32 %v1156, %v1162
    %1166 = vst.msk [vmem:[#allocation2] sm:$0xff] %vm404, %v1164
    %1167 = vst.msk [vmem:[#allocation2 + $0x8] sm:$0xff] %vm404, %v1165
    // Predicated region
    $region30: #{projected_gat_conv.1} parent=1 // pred_check
      _
    $region31: #{projected_gat_conv.1} parent=1 // pred_check_branch
      %1169 = sbr.rel (0) target = $region33
    $region32: #{projected_gat_conv.1} parent=1 // pred_region
      %s1171 = ssub.s32 256, 256
      %1172 = vsyncadd [#allocation3], %s1171
      %s1173 = sshll.u32 [#allocation2], 4
      %s1174 = int_to_ptr.vmem [resolvable:$true] %s1173
      %1179 = dma.vmem_to_hbm [thread:$0]  %s1174, 256, %s7, [#allocation3], 128, 128, 8
    $region33: #{projected_gat_conv.1} parent=1 // pred_fallthru
      _
    // Predicated region
    $region34: #{projected_gat_conv.1} parent=1 // pred_check
      _
    $region35: #{projected_gat_conv.1} parent=1 // pred_check_branch
      %1181 = sbr.rel (0) target = $region37
    $region36: #{projected_gat_conv.1} parent=1 // pred_region
      %1182 = dma.done [#allocation3], 256
    $region37: #{projected_gat_conv.1} parent=1 // pred_fallthru
      _
    %1183 = vsyncpa [#allocation3], 1

</llo_original>
